<compile_context>
chip_gen: v5e
topology: v5e:2x2
jax: 0.10.0
libtpu: 0.0.40
codegen_flags: <defaults>
</compile_context>

<pallas_src>
import jax
import jax.numpy as jnp
from jax.experimental import pallas as pl
from jax.experimental.pallas import tpu as pltpu


def _sobel_kernel(x_ref, o_ref):
    # x_ref: VMEM (NB, H,  W )
    # o_ref: VMEM (NB, Ho, Wo)   with Ho = H-2, Wo = W-2
    x = x_ref[...]
    if x.dtype != jnp.float32:
        x = x.astype(jnp.float32)

    Ho = o_ref.shape[1]
    Wo = o_ref.shape[2]

    # Vertical (sublane) passes of the separable filters.
    x0 = x[:, 0:Ho, :]          # rows y
    x1 = x[:, 1:Ho + 1, :]      # rows y+1
    x2 = x[:, 2:Ho + 2, :]      # rows y+2
    vs = 2.0 * (x0 + x2) + 4.0 * x1     # vertical [2, 4, 2]   (feeds Gx)
    vd = x0 - x2                        # vertical [1, 0, -1]  (feeds Gy)

    # Horizontal (lane) passes.
    gx = vs[:, :, 0:Wo] - vs[:, :, 2:Wo + 2]                       # [1, 0, -1]
    gy = (2.0 * (vd[:, :, 0:Wo] + vd[:, :, 2:Wo + 2])
          + 4.0 * vd[:, :, 1:Wo + 1])                              # [2, 4, 2]

    # square -> channel-sum -> sqrt, fused.
    mag = jnp.sqrt(gx * gx + gy * gy)
    o_ref[...] = mag.astype(o_ref.dtype)


def _pick_batch_block(n: int, bytes_per_image: int,
                      budget: int = 4 * 1024 * 1024) -> int:
    """Largest divisor of n whose per-step block stays within `budget` bytes."""
    nb = 1
    for d in range(1, n + 1):
        if n % d == 0 and d * bytes_per_image <= budget:
            nb = d
    return nb


def sobel(img: jax.Array) -> jax.Array:
    """Pallas equivalent of Sobel.forward(img).  img: (N, 1, H, W)."""
    N, C, H, W = img.shape
    assert C == 1, "Sobel module expects a single input channel"
    assert H >= 3 and W >= 3, "valid 3x3 convolution needs H, W >= 3"
    Ho, Wo = H - 2, W - 2

    # Drop the singleton channel dim (free metadata reshape in XLA) so the
    # kernel works on clean (N, H, W) blocks.
    x = img.reshape(N, H, W)

    itemsize = jnp.dtype(img.dtype).itemsize
    bytes_per_image = (H * W + Ho * Wo) * itemsize
    nb = _pick_batch_block(N, bytes_per_image)

    out = pl.pallas_call(
        _sobel_kernel,
        out_shape=jax.ShapeDtypeStruct((N, Ho, Wo), img.dtype),
        grid=(N // nb,),
        in_specs=[pl.BlockSpec((nb, H, W), lambda i: (i, 0, 0))],
        out_specs=pl.BlockSpec((nb, Ho, Wo), lambda i: (i, 0, 0)),
        compiler_params=pltpu.CompilerParams(
            dimension_semantics=("parallel",)),
    )(x)

    return out[:, None, :, :]


def _sobel_reference(img: jax.Array) -> jax.Array:
    """Plain-JAX reference with the original (non-separable) 9-tap math."""
    N, C, H, W = img.shape
    Ho, Wo = H - 2, W - 2
    Gx = jnp.array([[2.0, 0.0, -2.0],
                    [4.0, 0.0, -4.0],
                    [2.0, 0.0, -2.0]], dtype=jnp.float32)
    Gy = jnp.array([[2.0, 4.0, 2.0],
                    [0.0, 0.0, 0.0],
                    [-2.0, -4.0, -2.0]], dtype=jnp.float32)
    x = img[:, 0].astype(jnp.float32)                   # (N, H, W)
    gx = jnp.zeros((N, Ho, Wo), jnp.float32)
    gy = jnp.zeros((N, Ho, Wo), jnp.float32)
    for ky in range(3):
        for kx in range(3):
            patch = x[:, ky:ky + Ho, kx:kx + Wo]
            gx = gx + Gx[ky, kx] * patch
            gy = gy + Gy[ky, kx] * patch
    return jnp.sqrt(gx * gx + gy * gy)[:, None].astype(img.dtype)


if __name__ == "__main__":
    key = jax.random.PRNGKey(0)
    # batch=2, channels=1 (Conv2d(in_channels=1, ...)), spatial=16
    img = jax.random.uniform(key, (2, 1, 16, 16), dtype=jnp.float32)

    out = sobel(img)
    out = jax.block_until_ready(out)

    ref = _sobel_reference(img)
    assert out.shape == (2, 1, 14, 14), out.shape
    assert jnp.allclose(out, ref, atol=1e-4, rtol=1e-4), "mismatch vs reference"

    print("KERNEL_OK")
</pallas_src>

<mosaic_0001>
module attributes {stable_mosaic.version = 11 : i64} {
  func.func @_sobel_kernel(%arg0: i32, %arg1: memref<2x16x16xf32, #tpu.memory_space<vmem>>, %arg2: memref<2x14x14xf32, #tpu.memory_space<vmem>>) attributes {dimension_semantics = [#tpu.dimension_semantics<parallel>], iteration_bounds = array<i64: 1>, scalar_prefetch = 0 : i64, scratch_operands = 0 : i64, tpu.core_type = #tpu.core_type<tc>, window_params = [{transform_indices = @transform_0, window_bounds = array<i64: 2, 16, 16>}, {transform_indices = @transform_1, window_bounds = array<i64: 2, 14, 14>}]} {
    %c0 = arith.constant 0 : index
    %c0_0 = arith.constant 0 : index
    %c0_1 = arith.constant 0 : index
    %0 = vector.load %arg1[%c0, %c0_0, %c0_1] : memref<2x16x16xf32, #tpu.memory_space<vmem>>, vector<2x16x16xf32>
    %1 = vector.extract_strided_slice %0 {offsets = [0, 0, 0], sizes = [2, 14, 16], strides = [1, 1, 1]} : vector<2x16x16xf32> to vector<2x14x16xf32>
    %2 = vector.extract_strided_slice %0 {offsets = [0, 1, 0], sizes = [2, 14, 16], strides = [1, 1, 1]} : vector<2x16x16xf32> to vector<2x14x16xf32>
    %3 = vector.extract_strided_slice %0 {offsets = [0, 2, 0], sizes = [2, 14, 16], strides = [1, 1, 1]} : vector<2x16x16xf32> to vector<2x14x16xf32>
    %4 = arith.addf %1, %3 : vector<2x14x16xf32>
    %cst = arith.constant 2.000000e+00 : f32
    %5 = vector.broadcast %cst : f32 to vector<2x14x16xf32>
    %6 = arith.mulf %5, %4 : vector<2x14x16xf32>
    %cst_2 = arith.constant 4.000000e+00 : f32
    %7 = vector.broadcast %cst_2 : f32 to vector<2x14x16xf32>
    %8 = arith.mulf %7, %2 : vector<2x14x16xf32>
    %9 = arith.addf %6, %8 : vector<2x14x16xf32>
    %10 = arith.subf %1, %3 : vector<2x14x16xf32>
    %11 = vector.extract_strided_slice %9 {offsets = [0, 0, 0], sizes = [2, 14, 14], strides = [1, 1, 1]} : vector<2x14x16xf32> to vector<2x14x14xf32>
    %12 = vector.extract_strided_slice %9 {offsets = [0, 0, 2], sizes = [2, 14, 14], strides = [1, 1, 1]} : vector<2x14x16xf32> to vector<2x14x14xf32>
    %13 = arith.subf %11, %12 : vector<2x14x14xf32>
    %14 = vector.extract_strided_slice %10 {offsets = [0, 0, 0], sizes = [2, 14, 14], strides = [1, 1, 1]} : vector<2x14x16xf32> to vector<2x14x14xf32>
    %15 = vector.extract_strided_slice %10 {offsets = [0, 0, 2], sizes = [2, 14, 14], strides = [1, 1, 1]} : vector<2x14x16xf32> to vector<2x14x14xf32>
    %16 = arith.addf %14, %15 : vector<2x14x14xf32>
    %cst_3 = arith.constant 2.000000e+00 : f32
    %17 = vector.broadcast %cst_3 : f32 to vector<2x14x14xf32>
    %18 = arith.mulf %17, %16 : vector<2x14x14xf32>
    %19 = vector.extract_strided_slice %10 {offsets = [0, 0, 1], sizes = [2, 14, 14], strides = [1, 1, 1]} : vector<2x14x16xf32> to vector<2x14x14xf32>
    %cst_4 = arith.constant 4.000000e+00 : f32
    %20 = vector.broadcast %cst_4 : f32 to vector<2x14x14xf32>
    %21 = arith.mulf %20, %19 : vector<2x14x14xf32>
    %22 = arith.addf %18, %21 : vector<2x14x14xf32>
    %23 = arith.mulf %13, %13 : vector<2x14x14xf32>
    %24 = arith.mulf %22, %22 : vector<2x14x14xf32>
    %25 = arith.addf %23, %24 : vector<2x14x14xf32>
    %26 = math.sqrt %25 : vector<2x14x14xf32>
    %c0_5 = arith.constant 0 : index
    %c0_6 = arith.constant 0 : index
    %c0_7 = arith.constant 0 : index
    %27 = vector.load %arg2[%c0_5, %c0_6, %c0_7] : memref<2x14x14xf32, #tpu.memory_space<vmem>>, vector<2x14x14xf32>
    tpu.vector_store %arg2[%c0_5, %c0_6, %c0_7], %26 {strides = array<i32>} : memref<2x14x14xf32, #tpu.memory_space<vmem>>, vector<2x14x14xf32>,
    return
  }
  func.func @transform_0(%arg0: i32) -> (i32, i32, i32) {
    %c0_i32 = arith.constant 0 : i32
    %c0_i32_0 = arith.constant 0 : i32
    %c0_i32_1 = arith.constant 0 : i32
    return %arg0, %c0_i32, %c0_i32_0 : i32, i32, i32
  }
  func.func @transform_1(%arg0: i32) -> (i32, i32, i32) {
    %c0_i32 = arith.constant 0 : i32
    %c0_i32_0 = arith.constant 0 : i32
    %c0_i32_1 = arith.constant 0 : i32
    return %arg0, %c0_i32, %c0_i32_0 : i32, i32, i32
  }
}

</mosaic_0001>

<llo_original>
// kernel: tpu_custom_call.1
$region0: #{tpu_custom_call.1}
  #allocation0 [shape = 'u32[]', space=smem, size = 0x4, offset = 0x4, fixed_abs, tag = 'smem constant byte address 0x4 - core index']
  #allocation1 [shape = 'u32[72,128]{1,0:T(1,128)}', space=vmem, size = 0x9000, scoped, tag = 'internal scratch']
  %s0 = inlined_call_operand.hbm [shape: f32[2,16,16], index: 0, kind: input, shape index: {}]
  %s1 = inlined_call_operand.vmem [shape: f32[2,14,14], index: 1, kind: output, shape index: {}]
  %s2 = sld [smem:[#allocation0]]
  $region18: #{tpu_custom_call.1} parent=0
    _
  %s4 = ssub.s32 1, %s2
  %s5 = scalar_select 0, %s4, %s2
  $region1: #{tpu_custom_call.1} parent=0
    #allocation2 [shape = 'u8[16384]{0}', space=vmem, size = 0x4000, scoped, tag = 'input window, operand 0, single buffered']
    #allocation3 [shape = 's32[1]{0}', space=sflag, size = 0x4, scoped, tag = 'scoped memory for tpu_custom_call.1']
    %6 = vsyncpa [#allocation3], 0
    // Predicated region
    $region2: #{tpu_custom_call.1} parent=1 // pred_check
      _
    $region3: #{tpu_custom_call.1} parent=1 // pred_check_branch
      %8 = sbr.rel (0) target = $region5
    $region4: #{tpu_custom_call.1} parent=1 // pred_region
      %10 = vsyncadd [#allocation3], 0
      %s11 = sshll.u32 %s0, 4
      %s12 = int_to_ptr.hbm [resolvable:$true] %s11
      %s13 = sshll.u32 [#allocation2], 4
      %s14 = int_to_ptr.vmem [resolvable:$true] %s13
      %19 = dma.hbm_to_vmem [thread:$0]  %s12, 512, %s14, [#allocation3], 128, 128, 8
    $region5: #{tpu_custom_call.1} parent=1 // pred_fallthru
      _
    // Predicated region
    $region6: #{tpu_custom_call.1} parent=1 // pred_check
      _
    $region7: #{tpu_custom_call.1} parent=1 // pred_check_branch
      %21 = sbr.rel (0) target = $region9
    $region8: #{tpu_custom_call.1} parent=1 // pred_region
      %23 = dma.done [#allocation3], 512
    $region9: #{tpu_custom_call.1} parent=1 // pred_fallthru
      _
    %v24 = vld [vmem:[#allocation2] sm:$0xff]
    %v25 = vld [vmem:[#allocation2 + $0x8] sm:$0xff]
    %v26 = vld [vmem:[#allocation2 + $0x10] sm:$0xff]
    %v27 = vld [vmem:[#allocation2 + $0x18] sm:$0xff]
    %vm32 = vcmask 1045504
    %v33 = vrot.slane %v24, 2
    %v34 = vrot.slane %v25, 2
    %v35 = vsel %vm32, %v33, %v34
    %v36 = vrot.slane %v26, 2
    %v37 = vrot.slane %v27, 2
    %v38 = vsel %vm32, %v36, %v37
    %v43 = vadd.f32 %v24, %v35
    %v44 = vadd.f32 %v25, %v34
    %v45 = vadd.f32 %v26, %v38
    %v46 = vadd.f32 %v27, %v37
    %v47 = vmul.f32 %v43, 2.0
    %v48 = vmul.f32 %v44, 2.0
    %v49 = vmul.f32 %v45, 2.0
    %v50 = vmul.f32 %v46, 2.0
    %v51 = vmul.f32 %v24, 4.0
    %v52 = vmul.f32 %v25, 4.0
    %v53 = vmul.f32 %v26, 4.0
    %v54 = vmul.f32 %v27, 4.0
    %vm59 = vcmask 1046528
    %v60 = vrot.slane %v51, 1
    %v61 = vrot.slane %v52, 1
    %v62 = vsel %vm59, %v60, %v61
    %v63 = vrot.slane %v53, 1
    %v64 = vrot.slane %v54, 1
    %v65 = vsel %vm59, %v63, %v64
    %v70 = vadd.f32 %v47, %v62
    %v71 = vadd.f32 %v48, %v61
    %v72 = vadd.f32 %v49, %v65
    %v73 = vadd.f32 %v50, %v64
    %v74 = vsub.f32 %v24, %v35
    %v75 = vsub.f32 %v25, %v34
    %v76 = vsub.f32 %v26, %v38
    %v77 = vsub.f32 %v27, %v37
    %82 = vrot.lane.b32.xlu0 %v70, 126
    %v83 = vpop.permute.xlu0 %82
    %84 = vrot.lane.b32.xlu0 %v71, 126
    %v85 = vpop.permute.xlu0 %84
    %86 = vrot.lane.b32.xlu0 %v72, 126
    %v87 = vpop.permute.xlu0 %86
    %88 = vrot.lane.b32.xlu0 %v73, 126
    %v89 = vpop.permute.xlu0 %88
    %v94 = vsub.f32 %v70, %v83
    %v95 = vsub.f32 %v71, %v85
    %v96 = vsub.f32 %v72, %v87
    %v97 = vsub.f32 %v73, %v89
    %102 = vrot.lane.b32.xlu0 %v74, 126
    %v103 = vpop.permute.xlu0 %102
    %104 = vrot.lane.b32.xlu0 %v75, 126
    %v105 = vpop.permute.xlu0 %104
    %106 = vrot.lane.b32.xlu0 %v76, 126
    %v107 = vpop.permute.xlu0 %106
    %108 = vrot.lane.b32.xlu0 %v77, 126
    %v109 = vpop.permute.xlu0 %108
    %v114 = vadd.f32 %v74, %v103
    %v115 = vadd.f32 %v75, %v105
    %v116 = vadd.f32 %v76, %v107
    %v117 = vadd.f32 %v77, %v109
    %v118 = vmul.f32 %v114, 2.0
    %v119 = vmul.f32 %v115, 2.0
    %v120 = vmul.f32 %v116, 2.0
    %v121 = vmul.f32 %v117, 2.0
    %v122 = vmul.f32 %v74, 4.0
    %v123 = vmul.f32 %v75, 4.0
    %v124 = vmul.f32 %v76, 4.0
    %v125 = vmul.f32 %v77, 4.0
    %130 = vrot.lane.b32.xlu0 %v122, 127
    %v131 = vpop.permute.xlu0 %130
    %132 = vrot.lane.b32.xlu0 %v123, 127
    %v133 = vpop.permute.xlu0 %132
    %134 = vrot.lane.b32.xlu0 %v124, 127
    %v135 = vpop.permute.xlu0 %134
    %136 = vrot.lane.b32.xlu0 %v125, 127
    %v137 = vpop.permute.xlu0 %136
    %v142 = vadd.f32 %v118, %v131
    %v143 = vadd.f32 %v119, %v133
    %v144 = vadd.f32 %v120, %v135
    %v145 = vadd.f32 %v121, %v137
    %v146 = vmul.f32 %v94, %v94
    %v147 = vmul.f32 %v95, %v95
    %v148 = vmul.f32 %v96, %v96
    %v149 = vmul.f32 %v97, %v97
    %v150 = vmul.f32 %v142, %v142
    %v151 = vmul.f32 %v143, %v143
    %v152 = vmul.f32 %v144, %v144
    %v153 = vmul.f32 %v145, %v145
    %v154 = vadd.f32 %v146, %v150
    %v155 = vadd.f32 %v147, %v151
    %v156 = vadd.f32 %v148, %v152
    %v157 = vadd.f32 %v149, %v153
    %v158 = vrsqrt.pop %v154
    %v159 = vmul.f32 %v158, %v154
    %v160 = vmul.f32 %v159, %v158
    %v161 = vmul.f32 0.5, %v160
    %v162 = vsub.f32 1.5, %v161
    %v163 = vmul.f32 %v158, %v162
    %v164 = vmul.f32 %v154, %v163
    %vm165 = vcmp.eq.f32.partialorder %v154, inf
    %v166 = vsel %vm165, %v154, %v164
    %vm167 = vcmp.eq.f32.partialorder %v154, 0.0
    %v168 = vand.u32 %v154, 2147483648
    %v169 = vsel %vm167, %v168, %v166
    %v170 = vrsqrt.pop %v155
    %v171 = vmul.f32 %v170, %v155
    %v172 = vmul.f32 %v171, %v170
    %v173 = vmul.f32 0.5, %v172
    %v174 = vsub.f32 1.5, %v173
    %v175 = vmul.f32 %v170, %v174
    %v176 = vmul.f32 %v155, %v175
    %vm177 = vcmp.eq.f32.partialorder %v155, inf
    %v178 = vsel %vm177, %v155, %v176
    %vm179 = vcmp.eq.f32.partialorder %v155, 0.0
    %v180 = vand.u32 %v155, 2147483648
    %v181 = vsel %vm179, %v180, %v178
    %v182 = vrsqrt.pop %v156
    %v183 = vmul.f32 %v182, %v156
    %v184 = vmul.f32 %v183, %v182
    %v185 = vmul.f32 0.5, %v184
    %v186 = vsub.f32 1.5, %v185
    %v187 = vmul.f32 %v182, %v186
    %v188 = vmul.f32 %v156, %v187
    %vm189 = vcmp.eq.f32.partialorder %v156, inf
    %v190 = vsel %vm189, %v156, %v188
    %vm191 = vcmp.eq.f32.partialorder %v156, 0.0
    %v192 = vand.u32 %v156, 2147483648
    %v193 = vsel %vm191, %v192, %v190
    %v194 = vrsqrt.pop %v157
    %v195 = vmul.f32 %v194, %v157
    %v196 = vmul.f32 %v195, %v194
    %v197 = vmul.f32 0.5, %v196
    %v198 = vsub.f32 1.5, %v197
    %v199 = vmul.f32 %v194, %v198
    %v200 = vmul.f32 %v157, %v199
    %vm201 = vcmp.eq.f32.partialorder %v157, inf
    %v202 = vsel %vm201, %v157, %v200
    %vm203 = vcmp.eq.f32.partialorder %v157, 0.0
    %v204 = vand.u32 %v157, 2147483648
    %v205 = vsel %vm203, %v204, %v202
    %vm206 = vcmask 113664
    %207 = vst.msk [vmem:[%s1] sm:$0xff] %vm206, %v169
    %vm208 = vcmask 111616
    %209 = vst.msk [vmem:[%s1 + $0x8] sm:$0x3f] %vm208, %v181
    %210 = vst.msk [vmem:[%s1 + $0x10] sm:$0xff] %vm206, %v193
    %211 = vst.msk [vmem:[%s1 + $0x18] sm:$0x3f] %vm208, %v205
    // Predicated region
    $region10: #{tpu_custom_call.1} parent=1 // pred_check
      _
    $region11: #{tpu_custom_call.1} parent=1 // pred_check_branch
      %213 = sbr.rel (0) target = $region13
    $region12: #{tpu_custom_call.1} parent=1 // pred_region
      _
    $region13: #{tpu_custom_call.1} parent=1 // pred_fallthru
      _
    // Predicated region
    $region14: #{tpu_custom_call.1} parent=1 // pred_check
      _
    $region15: #{tpu_custom_call.1} parent=1 // pred_check_branch
      %215 = sbr.rel (0) target = $region17
    $region16: #{tpu_custom_call.1} parent=1 // pred_region
      _
    $region17: #{tpu_custom_call.1} parent=1 // pred_fallthru
      _
    %216 = vsyncpa [#allocation3], 1

</llo_original>
